<compile_context>
chip_gen: v7x
topology: tpu7x:2x2x1
jax: 0.10.0
libtpu: 0.0.40
codegen_flags: <defaults>
</compile_context>

<pallas_src>
import math

import numpy as np
import jax
import jax.numpy as jnp
from jax.experimental import pallas as pl
from jax.experimental.pallas import tpu as pltpu


# ----------------------------------------------------------------------------
# Host-side construction of the per-cut (crop + resample) matrices.
# ----------------------------------------------------------------------------
def _sinc(x):
    safe = np.where(x != 0, x, 1.0)
    return np.where(x != 0, np.sin(np.pi * x) / (np.pi * safe), 1.0)


def _lanczos(x, a):
    cond = np.logical_and(-a < x, x < a)
    out = np.where(cond, _sinc(x) * _sinc(x / a), 0.0)
    return out / out.sum()


def _ramp(ratio, width):
    n = math.ceil(width / ratio + 1)
    out = np.arange(n, dtype=np.float64) * ratio
    full = np.concatenate([-out[1:][::-1], out])
    return full[1:-1]


def _reflect_index(j, n):
    # PyTorch 'reflect' padding (single reflection, valid for pad < n).
    if j < 0:
        j = -j
    if j >= n:
        j = 2 * (n - 1) - j
    return j


def _lanczos_conv_matrix(src, dst):
    """(src, src) lanczos anti-alias conv matrix (reflect pad) when dst < src."""
    if dst >= src:
        return np.eye(src, dtype=np.float64)
    k = _lanczos(_ramp(dst / src, 2), 2)
    K = k.shape[0]
    pad = (K - 1) // 2
    C = np.zeros((src, src), dtype=np.float64)
    for i in range(src):
        for t in range(K):
            C[i, _reflect_index(i + t - pad, src)] += k[t]
    return C


def _cubic_conv1(t, A):
    return ((A + 2) * t - (A + 3)) * t * t + 1


def _cubic_conv2(t, A):
    return ((A * t - 5 * A) * t + 8 * A) * t - 4 * A


def _bicubic_matrix(dst, src):
    """(dst, src) bicubic interpolation matrix, align_corners=True, a=-0.75."""
    A = -0.75
    B = np.zeros((dst, src), dtype=np.float64)
    for i in range(dst):
        real = (i * (src - 1) / (dst - 1)) if dst > 1 else 0.0
        in0 = int(math.floor(real))
        t = real - in0
        coeffs = (_cubic_conv2(t + 1, A), _cubic_conv1(t, A),
                  _cubic_conv1(1 - t, A), _cubic_conv2(2 - t, A))
        for k in range(4):
            j = min(max(in0 - 1 + k, 0), src - 1)
            B[i, j] += coeffs[k]
    return B


def _resample_matrix(src, dst):
    """(dst, src): bicubic(align_corners=True) o lanczos anti-alias."""
    return _bicubic_matrix(dst, src) @ _lanczos_conv_matrix(src, dst)


def _build_cut_matrices(H, W, cut_size, cutn, cut_pow, seed):
    """Per-cut crop+resample maps: M_y (cutn, CUT, H) and M_x^T (cutn, W, CUT)."""
    sideY, sideX = H, W
    max_size = min(sideX, sideY)
    min_size = min(sideX, sideY, cut_size)
    rng = np.random.default_rng(seed)
    my_all = np.zeros((cutn, cut_size, H), dtype=np.float32)
    mxt_all = np.zeros((cutn, W, cut_size), dtype=np.float32)
    for ci in range(cutn):
        size = int(float(rng.random()) ** cut_pow * (max_size - min_size) + min_size)
        offsetx = int(rng.integers(0, sideX - size + 1))
        offsety = int(rng.integers(0, sideY - size + 1))
        R = _resample_matrix(size, cut_size)                       # (CUT, size) f64
        my_all[ci, :, offsety:offsety + size] = R                  # crop rows baked in
        mxt_all[ci, offsetx:offsetx + size, :] = R.T               # crop cols baked in
    return my_all, mxt_all


# ----------------------------------------------------------------------------
# Pallas kernel:  per (plane-block, cut):   clamp(M_y @ X_b @ M_x^T, 0, 1)
# ----------------------------------------------------------------------------
def _cutouts_kernel(my_ref, x_ref, mxt_ref, o_ref):
    # my_ref : (1, CUT, H)       this cut's row (height) resample map
    # x_ref  : (Bblk, H, W)      block of full image planes (resident across cuts)
    # mxt_ref: (1, W, CUT)       this cut's column (width) resample map, transposed
    # o_ref  : (1, Bblk, CUT, CUT)
    bblk, h, w = x_ref.shape
    cut = my_ref.shape[1]

    x = x_ref[...].astype(jnp.float32)
    my = my_ref[0].astype(jnp.float32)            # (CUT, H)
    mxt = mxt_ref[0].astype(jnp.float32)          # (W, CUT)

    # Width resample as ONE big MXU matmul:  (Bblk*H, W) @ (W, CUT).
    # (reshape only regroups leading<->sublane dims; the lane dim is untouched)
    t = jnp.dot(x.reshape(bblk * h, w), mxt,
                preferred_element_type=jnp.float32)               # (Bblk*H, CUT)
    t = t.reshape(bblk, h, cut)

    # Height resample as a batched matmul against the (broadcast) M_y.
    myb = jnp.broadcast_to(my, (bblk, cut, h))
    out = jnp.einsum('bch,bhk->bck', myb, t,
                     preferred_element_type=jnp.float32)          # (Bblk, CUT, CUT)

    # ClampWithGrad forward == clamp; done in f32 before the store cast.
    o_ref[0] = jnp.clip(out, 0.0, 1.0).astype(o_ref.dtype)


def _choose_plane_block(B, H, W, cut, itemsize):
    """Largest divisor of B whose per-step VMEM footprint stays well under budget."""
    per_plane = (2 * H * W * itemsize              # double-buffered input block
                 + 2 * cut * cut * itemsize        # double-buffered output block
                 + 4 * (H * W + 2 * H * cut + cut * cut))   # f32 in-kernel temporaries
    budget = 12 << 20                              # conservative vs v7x scoped VMEM
    if B * per_plane <= budget:
        return B
    best = 1
    for d in range(1, B + 1):
        if B % d == 0 and d * per_plane <= budget:
            best = d
    return best


def _cutouts_pallas(planes, my_all, mxt_all, cut_size):
    """planes: (B, H, W).  Returns (cutn, B, cut_size, cut_size)."""
    B, H, W = planes.shape
    cutn = my_all.shape[0]
    bblk = _choose_plane_block(B, H, W, cut_size, np.dtype(planes.dtype).itemsize)
    nb = B // bblk

    return pl.pallas_call(
        _cutouts_kernel,
        out_shape=jax.ShapeDtypeStruct((cutn, B, cut_size, cut_size), planes.dtype),
        grid=(nb, cutn),                       # cut axis innermost -> x block stays resident
        in_specs=[
            pl.BlockSpec((1, cut_size, H), lambda bb, c: (c, 0, 0)),
            pl.BlockSpec((bblk, H, W), lambda bb, c: (bb, 0, 0)),
            pl.BlockSpec((1, W, cut_size), lambda bb, c: (c, 0, 0)),
        ],
        out_specs=pl.BlockSpec((1, bblk, cut_size, cut_size),
                               lambda bb, c: (c, bb, 0, 0)),
        compiler_params=pltpu.CompilerParams(
            dimension_semantics=("parallel", "parallel")),
    )(my_all, planes, mxt_all)


# ----------------------------------------------------------------------------
# MakeCutouts forward
# ----------------------------------------------------------------------------
def make_cutouts(x, cut_size, cutn, cut_pow=1.0, seed=0):
    """x: (N, C, H, W) in [0, 1].  Returns (cutn*N, C, cut_size, cut_size)."""
    N, C, H, W = x.shape
    my_all, mxt_all = _build_cut_matrices(H, W, cut_size, cutn, cut_pow, seed)
    planes = x.reshape(N * C, H, W)
    out = _cutouts_pallas(planes, jnp.asarray(my_all), jnp.asarray(mxt_all), cut_size)
    # (cutn, N*C, CUT, CUT) -> (cutn*N, C, CUT, CUT)   (== torch.cat along batch)
    return out.reshape(cutn, N, C, cut_size, cut_size).reshape(
        cutn * N, C, cut_size, cut_size)


if __name__ == "__main__":
    key = jax.random.PRNGKey(0)
    N, C, H, W = 2, 4, 16, 16
    cut_size, cutn, cut_pow, seed = 8, 4, 1.0, 0

    x = jax.random.uniform(key, (N, C, H, W), dtype=jnp.float32)

    out = make_cutouts(x, cut_size, cutn, cut_pow, seed=seed)
    out = jax.block_until_ready(out)

    assert out.shape == (cutn * N, C, cut_size, cut_size), out.shape
    assert out.dtype == x.dtype
    assert bool(jnp.all(out >= 0.0)) and bool(jnp.all(out <= 1.0))

    # Reference: apply the same crop+resample matrices with numpy (f64).
    my_all, mxt_all = _build_cut_matrices(H, W, cut_size, cutn, cut_pow, seed)
    planes_np = np.asarray(x, dtype=np.float64).reshape(N * C, H, W)
    ref = np.einsum('kch,bhw,kwd->kbcd', my_all.astype(np.float64), planes_np,
                    mxt_all.astype(np.float64))
    ref = np.clip(ref, 0.0, 1.0).reshape(cutn, N, C, cut_size, cut_size)
    ref = ref.reshape(cutn * N, C, cut_size, cut_size)
    np.testing.assert_allclose(np.asarray(out), ref, atol=2e-2, rtol=0)

    print("KERNEL_OK")
</pallas_src>

<mosaic_0001>
module attributes {stable_mosaic.version = 11 : i64} {
  func.func @_cutouts_kernel(%arg0: i32, %arg1: i32, %arg2: memref<1x8x16xf32, #tpu.memory_space<vmem>>, %arg3: memref<8x16x16xf32, #tpu.memory_space<vmem>>, %arg4: memref<1x16x8xf32, #tpu.memory_space<vmem>>, %arg5: memref<1x8x8x8xf32, #tpu.memory_space<vmem>>) attributes {dimension_semantics = [#tpu.dimension_semantics<parallel>, #tpu.dimension_semantics<parallel>], iteration_bounds = array<i64: 1, 4>, scalar_prefetch = 0 : i64, scratch_operands = 0 : i64, tpu.core_type = #tpu.core_type<tc>, window_params = [{transform_indices = @transform_0, window_bounds = array<i64: 1, 8, 16>}, {transform_indices = @transform_1, window_bounds = array<i64: 8, 16, 16>}, {transform_indices = @transform_2, window_bounds = array<i64: 1, 16, 8>}, {transform_indices = @transform_3, window_bounds = array<i64: 1, 8, 8, 8>}]} {
    %c0 = arith.constant 0 : index
    %c0_0 = arith.constant 0 : index
    %c0_1 = arith.constant 0 : index
    %0 = vector.load %arg3[%c0, %c0_0, %c0_1] : memref<8x16x16xf32, #tpu.memory_space<vmem>>, vector<8x16x16xf32>
    %c0_2 = arith.constant 0 : index
    %c0_3 = arith.constant 0 : index
    %c0_4 = arith.constant 0 : index
    %1 = vector.load %arg2[%c0_2, %c0_3, %c0_4] : memref<1x8x16xf32, #tpu.memory_space<vmem>>, vector<1x8x16xf32>
    %2 = vector.shape_cast %1 : vector<1x8x16xf32> to vector<8x16xf32>
    %c0_5 = arith.constant 0 : index
    %c0_6 = arith.constant 0 : index
    %c0_7 = arith.constant 0 : index
    %3 = vector.load %arg4[%c0_5, %c0_6, %c0_7] : memref<1x16x8xf32, #tpu.memory_space<vmem>>, vector<1x16x8xf32>
    %4 = vector.shape_cast %3 : vector<1x16x8xf32> to vector<16x8xf32>
    %5 = vector.shape_cast %0 : vector<8x16x16xf32> to vector<128x16xf32>
    %cst = arith.constant dense<0.000000e+00> : vector<128x8xf32>
    %6 = tpu.matmul %5, %4, %cst {dimension_numbers = #tpu.dot_dimension_numbers<[1], [0], [0], [1], [0, 0, 1, 1], [], []>} : vector<128x16xf32>, vector<16x8xf32>, vector<128x8xf32> -> vector<128x8xf32>
    %7 = vector.shape_cast %6 : vector<128x8xf32> to vector<8x16x8xf32>
    %8 = vector.shape_cast %2 : vector<8x16xf32> to vector<1x8x16xf32>
    %9 = vector.broadcast %8 : vector<1x8x16xf32> to vector<8x8x16xf32>
    "tpu.trace_start"() <{level = 10 : i32, message = "bch,bhk->bck"}> : () -> ()
    %cst_8 = arith.constant dense<0.000000e+00> : vector<8x8x8xf32>
    %10 = tpu.matmul %9, %7, %cst_8 {dimension_numbers = #tpu.dot_dimension_numbers<[2], [1], [1], [2], [0, 0, 0, 1, 1, 2], [0], [0]>} : vector<8x8x16xf32>, vector<8x16x8xf32>, vector<8x8x8xf32> -> vector<8x8x8xf32>
    %cst_9 = arith.constant 0.000000e+00 : f32
    %cst_10 = arith.constant 1.000000e+00 : f32
    "tpu.trace_stop"() : () -> ()
    %11 = vector.broadcast %cst_9 : f32 to vector<8x8x8xf32>
    %12 = arith.maximumf %11, %10 : vector<8x8x8xf32>
    %13 = vector.broadcast %cst_10 : f32 to vector<8x8x8xf32>
    %14 = arith.minimumf %13, %12 : vector<8x8x8xf32>
    %c0_11 = arith.constant 0 : index
    %c0_12 = arith.constant 0 : index
    %c0_13 = arith.constant 0 : index
    %c0_14 = arith.constant 0 : index
    %15 = vector.load %arg5[%c0_11, %c0_12, %c0_13, %c0_14] : memref<1x8x8x8xf32, #tpu.memory_space<vmem>>, vector<1x8x8x8xf32>
    %16 = vector.shape_cast %15 : vector<1x8x8x8xf32> to vector<8x8x8xf32>
    %17 = vector.shape_cast %14 : vector<8x8x8xf32> to vector<1x8x8x8xf32>
    tpu.vector_store %arg5[%c0_11, %c0_12, %c0_13, %c0_14], %17 {strides = array<i32>} : memref<1x8x8x8xf32, #tpu.memory_space<vmem>>, vector<1x8x8x8xf32>,
    return
  }
  func.func @transform_0(%arg0: i32, %arg1: i32) -> (i32, i32, i32) {
    %c0_i32 = arith.constant 0 : i32
    %c0_i32_0 = arith.constant 0 : i32
    %c0_i32_1 = arith.constant 0 : i32
    return %arg1, %c0_i32, %c0_i32_0 : i32, i32, i32
  }
  func.func @transform_1(%arg0: i32, %arg1: i32) -> (i32, i32, i32) {
    %c0_i32 = arith.constant 0 : i32
    %c0_i32_0 = arith.constant 0 : i32
    %c0_i32_1 = arith.constant 0 : i32
    return %arg0, %c0_i32, %c0_i32_0 : i32, i32, i32
  }
  func.func @transform_2(%arg0: i32, %arg1: i32) -> (i32, i32, i32) {
    %c0_i32 = arith.constant 0 : i32
    %c0_i32_0 = arith.constant 0 : i32
    %c0_i32_1 = arith.constant 0 : i32
    return %arg1, %c0_i32, %c0_i32_0 : i32, i32, i32
  }
  func.func @transform_3(%arg0: i32, %arg1: i32) -> (i32, i32, i32, i32) {
    %c0_i32 = arith.constant 0 : i32
    %c0_i32_0 = arith.constant 0 : i32
    %c0_i32_1 = arith.constant 0 : i32
    return %arg1, %arg0, %c0_i32, %c0_i32_0 : i32, i32, i32, i32
  }
}

</mosaic_0001>

<llo_original>
// kernel: tpu_custom_call.1
$region0: #{tpu_custom_call.1}
  #allocation0 [shape = 'u32[]', space=smem, size = 0x4, offset = 0x4, fixed_abs, tag = 'smem constant byte address 0x4 - core index']
  #allocation1 [shape = 'u32[144,128]{1,0:T(1,128)}', space=vmem, size = 0x12000, scoped, tag = 'internal scratch']
  %s0 = inlined_call_operand.vmem [shape: f32[4,8,16], index: 0, kind: input, shape index: {}]
  %s1 = inlined_call_operand.hbm [shape: f32[8,16,16], index: 1, kind: input, shape index: {}]
  %s2 = inlined_call_operand.vmem [shape: f32[4,16,8], index: 2, kind: input, shape index: {}]
  %s3 = inlined_call_operand.hbm [shape: f32[4,8,8,8], index: 3, kind: output, shape index: {}]
  %s4 = sld [smem:[#allocation0]]
  $region49: #{tpu_custom_call.1} parent=0
    _
  %s6 = ssub.s32 1, %s4
  %s7 = scalar_select 0, %s6, %s4
  $region1: #{tpu_custom_call.1} parent=0
    #allocation2 [shape = 'u8[65536]{0}', space=vmem, size = 0x10000, scoped, tag = 'input window, operand 1, single buffered']
    #allocation3 [shape = 's32[2]{0}', space=sflag, size = 0x8, scoped, tag = 'scoped memory for tpu_custom_call.1']
    #allocation4 [shape = 's32[2]{0}', space=sflag, size = 0x8, scoped, tag = 'scoped memory for tpu_custom_call.1']
    #allocation5 [shape = 'u8[65536]{0}', space=vmem, size = 0x10000, scoped, tag = 'output window, operand 0']
    %8 = vsyncpa [#allocation3], 0
    %9 = vsyncpa [#allocation4], 0
    %s10 = scalar_lea.sflag [#allocation4], 1
    %11 = vsyncpa %s10, 0
    loop: start=0, step=1, limit=6
    $region2: #{tpu_custom_call.1} parent=1 // loop_pre_header
      _
    $region3: #{tpu_custom_call.1} parent=1 // loop_header
      %s13 = sphi 0, %s17
      %p14 = scmp.ge.s32.totalorder %s13, 6
      %s20 = sphi 0, %s32
      %s21 = sphi 0, %s28
      %s22 = sphi 0, %s20
      %s23 = sphi 0, %s21
      %s24 = sphi 0, %s22
      %s25 = sphi 0, %s23
      %s35 = sphi 0, %s37
      %s38 = sphi 0, %s35
      %s39 = sphi 0, %s38
      %s55 = sphi 0, %s39
      %s61 = sphi 0, %s63
      %s64 = sphi 0, %s61
      %s65 = sphi 0, %s64
      %s81 = sphi 0, %s65
      %s87 = sphi 0, %s89
      %s90 = sphi 0, %s87
      %s91 = sphi 0, %s90
      %s107 = sphi 0, %s91
      %s115 = sphi 0, %s117
      %s118 = sphi 0, %s115
      %s119 = sphi 0, %s118
      %s135 = sphi 0, %s119
    $region4: #{tpu_custom_call.1} parent=1 // loop_header_branch
      %16 = sbr.rel (%p14) target = $region8
    $region5: #{tpu_custom_call.1} parent=1 // loop_body
      %s18 = ssub.s32 %s13, 1
      %s19 = ssub.s32 %s13, 2
      %s26 = sadd.s32 1, %s21
      %p27 = scmp.ge.s32.totalorder %s26, 4
      %s28 = scalar_select %p27, 0, %s26
      %s29 = sadd.s32 1, %s20
      %s30 = scalar_select %p27, %s29, %s20
      %p31 = scmp.ge.s32.totalorder %s30, 1
      %s32 = scalar_select %p31, 0, %s30
      %s33 = ssub.s32 %s21, %s28
      %p34 = scmp.eq.s32.totalorder %s33, 0
      %s36 = sadd.s32 %s35, 1
      %s37 = scalar_select %p34, %s35, %s36
      %p40 = pneg %p34
      %p41 = scmp.eq.s32.totalorder %s13, 3
      %p42 = por %p40, %p41
      %p43 = scmp.ne.s32.totalorder %s35, %s38
      %p44 = scmp.eq.s32.totalorder %s13, 0
      %p45 = por %p43, %p44
      %p46 = scmp.ne.s32.totalorder %s35, %s38
      %p47 = scmp.eq.s32.totalorder %s18, 3
      %p48 = por %p46, %p47
      %p49 = scmp.ne.s32.totalorder %s38, %s39
      %p50 = scmp.eq.s32.totalorder %s18, 0
      %p51 = por %p49, %p50
      %p52 = scmp.ne.s32.totalorder %s38, %s39
      %p53 = scmp.eq.s32.totalorder %s19, 3
      %p54 = por %p52, %p53
      %p56 = scmp.ne.s32.totalorder %s39, %s55
      %p57 = scmp.eq.s32.totalorder %s19, 0
      %p58 = por %p56, %p57
      %s59 = ssub.s32 %s20, %s32
      %p60 = scmp.eq.s32.totalorder %s59, 0
      %s62 = sadd.s32 %s61, 1
      %s63 = scalar_select %p60, %s61, %s62
      %p66 = pneg %p60
      %p67 = scmp.eq.s32.totalorder %s13, 3
      %p68 = por %p66, %p67
      %p69 = scmp.ne.s32.totalorder %s61, %s64
      %p70 = scmp.eq.s32.totalorder %s13, 0
      %p71 = por %p69, %p70
      %p72 = scmp.ne.s32.totalorder %s61, %s64
      %p73 = scmp.eq.s32.totalorder %s18, 3
      %p74 = por %p72, %p73
      %p75 = scmp.ne.s32.totalorder %s64, %s65
      %p76 = scmp.eq.s32.totalorder %s18, 0
      %p77 = por %p75, %p76
      %p78 = scmp.ne.s32.totalorder %s64, %s65
      %p79 = scmp.eq.s32.totalorder %s19, 3
      %p80 = por %p78, %p79
      %p82 = scmp.ne.s32.totalorder %s65, %s81
      %p83 = scmp.eq.s32.totalorder %s19, 0
      %p84 = por %p82, %p83
      %s85 = ssub.s32 %s21, %s28
      %p86 = scmp.eq.s32.totalorder %s85, 0
      %s88 = sadd.s32 %s87, 1
      %s89 = scalar_select %p86, %s87, %s88
      %p92 = pneg %p86
      %p93 = scmp.eq.s32.totalorder %s13, 3
      %p94 = por %p92, %p93
      %p95 = scmp.ne.s32.totalorder %s87, %s90
      %p96 = scmp.eq.s32.totalorder %s13, 0
      %p97 = por %p95, %p96
      %p98 = scmp.ne.s32.totalorder %s87, %s90
      %p99 = scmp.eq.s32.totalorder %s18, 3
      %p100 = por %p98, %p99
      %p101 = scmp.ne.s32.totalorder %s90, %s91
      %p102 = scmp.eq.s32.totalorder %s18, 0
      %p103 = por %p101, %p102
      %p104 = scmp.ne.s32.totalorder %s90, %s91
      %p105 = scmp.eq.s32.totalorder %s19, 3
      %p106 = por %p104, %p105
      %p108 = scmp.ne.s32.totalorder %s91, %s107
      %p109 = scmp.eq.s32.totalorder %s19, 0
      %p110 = por %p108, %p109
      %s111 = ssub.s32 %s21, %s28
      %s112 = ssub.s32 %s20, %s32
      %s113 = sor.u32 %s111, %s112
      %p114 = scmp.eq.s32.totalorder %s113, 0
      %s116 = sadd.s32 %s115, 1
      %s117 = scalar_select %p114, %s115, %s116
      %p120 = pneg %p114
      %p121 = scmp.eq.s32.totalorder %s13, 3
      %p122 = por %p120, %p121
      %p123 = scmp.ne.s32.totalorder %s115, %s118
      %p124 = scmp.eq.s32.totalorder %s13, 0
      %p125 = por %p123, %p124
      %p126 = scmp.ne.s32.totalorder %s115, %s118
      %p127 = scmp.eq.s32.totalorder %s18, 3
      %p128 = por %p126, %p127
      %p129 = scmp.ne.s32.totalorder %s118, %s119
      %p130 = scmp.eq.s32.totalorder %s18, 0
      %p131 = por %p129, %p130
      %p132 = scmp.ne.s32.totalorder %s118, %s119
      %p133 = scmp.eq.s32.totalorder %s19, 3
      %p134 = por %p132, %p133
      %p136 = scmp.ne.s32.totalorder %s119, %s135
      %p137 = scmp.eq.s32.totalorder %s19, 0
      %p138 = por %p136, %p137
      %p139 = scmp.le.s32.totalorder 1, %s13
      %p140 = scmp.lt.s32.totalorder %s13, 5
      %p141 = pnand %p139, %p140
      %p142 = pneg %p141
      // Predicated region
      $region9: #{tpu_custom_call.1} parent=5 // pred_check
        _
      $region10: #{tpu_custom_call.1} parent=5 // pred_check_branch
        %144 = sbr.rel (%p141) target = $region12
      $region11: #{tpu_custom_call.1} parent=5 // pred_region
        %s145 = ssub.s32 %s13, 1
        // Predicated region
        $region13: #{tpu_custom_call.1} parent=11 // pred_check
          %p146 = pneg %p77
        $region14: #{tpu_custom_call.1} parent=11 // pred_check_branch
          %148 = sbr.rel (%p146) target = $region16
        $region15: #{tpu_custom_call.1} parent=11 // pred_region
          %s149 = smul.u32 8, %s22
          %s151 = ssub.s32 2048, 2048
          %152 = vsyncadd [#allocation3], %s151
          %s153 = smul.addr %s149, 2
          %s154 = smul.addr %s153, 128
          %s155 = scalar_lea.hbm %s1, %s154
          %s156 = sshll.u32 [#allocation2], 4
          %s157 = int_to_ptr.vmem [resolvable:$true] %s156
          %162 = dma.hbm_to_vmem [thread:$0]  %s155, 2048, %s157, [#allocation3], 128, 128, 8
        $region16: #{tpu_custom_call.1} parent=11 // pred_fallthru
          _
      $region12: #{tpu_custom_call.1} parent=5 // pred_fallthru
        _
      %p163 = scmp.lt.s32.totalorder %s13, 4
      // Predicated region
      $region17: #{tpu_custom_call.1} parent=5 // pred_check
        %p164 = pneg %p163
      $region18: #{tpu_custom_call.1} parent=5 // pred_check_branch
        %166 = sbr.rel (%p164) target = $region20
      $region19: #{tpu_custom_call.1} parent=5 // pred_region
        // Predicated region
        $region21: #{tpu_custom_call.1} parent=19 // pred_check
          %p167 = pneg %p45
        $region22: #{tpu_custom_call.1} parent=19 // pred_check_branch
          %169 = sbr.rel (%p167) target = $region24
        $region23: #{tpu_custom_call.1} parent=19 // pred_region
          %p170 = scmp.lt.s32.totalorder %s21, 3
          %s171 = scalar_select %p170, %s21, 3
          %s172 = smul.addr %s171, 8
          %s173 = scalar_lea.vmem %s0, %s172
        $region24: #{tpu_custom_call.1} parent=19 // pred_fallthru
          _
        // Predicated region
        $region25: #{tpu_custom_call.1} parent=19 // pred_check
          %p174 = pneg %p97
        $region26: #{tpu_custom_call.1} parent=19 // pred_check_branch
          %176 = sbr.rel (%p174) target = $region28
        $region27: #{tpu_custom_call.1} parent=19 // pred_region
          %p177 = scmp.lt.s32.totalorder %s21, 3
          %s178 = scalar_select %p177, %s21, 3
          %s179 = smul.addr %s178, 2
          %s180 = smul.addr %s179, 8
          %s181 = scalar_lea.vmem %s2, %s180
        $region28: #{tpu_custom_call.1} parent=19 // pred_fallthru
          _
      $region20: #{tpu_custom_call.1} parent=5 // pred_fallthru
        _
      %p182 = scmp.le.s32.totalorder 1, %s13
      %p183 = scmp.lt.s32.totalorder %s13, 5
      %p184 = pnand %p182, %p183
      %p185 = pneg %p184
      // Predicated region
      $region29: #{tpu_custom_call.1} parent=5 // pred_check
        _
      $region30: #{tpu_custom_call.1} parent=5 // pred_check_branch
        %187 = sbr.rel (%p184) target = $region32
      $region31: #{tpu_custom_call.1} parent=5 // pred_region
        %s188 = ssub.s32 %s13, 1
        // Predicated region
        $region33: #{tpu_custom_call.1} parent=31 // pred_check
          %p189 = pneg %p77
        $region34: #{tpu_custom_call.1} parent=31 // pred_check_branch
          %191 = sbr.rel (%p189) target = $region36
        $region35: #{tpu_custom_call.1} parent=31 // pred_region
          %192 = dma.done [#allocation3], 2048
        $region36: #{tpu_custom_call.1} parent=31 // pred_fallthru
          _
        %p193 = scmp.lt.s32.totalorder %s23, 3
        %s194 = scalar_select %p193, %s23, 3
        %s195 = smul.addr %s194, 8
        %s196 = scalar_lea.vmem %s0, %s195
        %p197 = pneg %p51
        %p198 = pneg %p48
        %p199 = pneg %p77
        %p200 = pneg %p74
        %p201 = scmp.lt.s32.totalorder %s23, 3
        %s202 = scalar_select %p201, %s23, 3
        %s203 = smul.addr %s202, 2
        %s204 = smul.addr %s203, 8
        %s205 = scalar_lea.vmem %s2, %s204
        %p206 = pneg %p103
        %p207 = pneg %p100
        %p208 = pneg %p131
        %p209 = pneg %p128
        %s210 = sand.u32 %s118, 1
        %s211 = scalar_lea.sflag [#allocation4], %s210
        %s212 = sand.u32 %s118, 1
        %s213 = smul.addr %s212, 64
        %s214 = scalar_lea.vmem [#allocation5], %s213
        %p215 = scmp.lt.s32.totalorder %s23, 3
        %s216 = scalar_select %p215, %s23, 3
        %s217 = smul.addr %s216, 8
        %s218 = scalar_lea.vmem %s0, %s217
        %s219 = smul.u32 8, %s22
        %p220 = scmp.lt.s32.totalorder %s23, 3
        %s221 = scalar_select %p220, %s23, 3
        %s222 = smul.addr %s221, 2
        %s223 = smul.addr %s222, 8
        %s224 = scalar_lea.vmem %s2, %s223
        %s225 = smul.u32 8, %s22
        %v226 = vld [vmem:[#allocation2] sm:$0xff]
        %v227 = vld [vmem:[#allocation2 + $0x8] sm:$0xff]
        %v228 = vld [vmem:[#allocation2 + $0x10] sm:$0xff]
        %v229 = vld [vmem:[#allocation2 + $0x18] sm:$0xff]
        %v230 = vld [vmem:[#allocation2 + $0x20] sm:$0xff]
        %v231 = vld [vmem:[#allocation2 + $0x28] sm:$0xff]
        %v232 = vld [vmem:[#allocation2 + $0x30] sm:$0xff]
        %v233 = vld [vmem:[#allocation2 + $0x38] sm:$0xff]
        %v234 = vld [vmem:[#allocation2 + $0x40] sm:$0xff]
        %v235 = vld [vmem:[#allocation2 + $0x48] sm:$0xff]
        %v236 = vld [vmem:[#allocation2 + $0x50] sm:$0xff]
        %v237 = vld [vmem:[#allocation2 + $0x58] sm:$0xff]
        %v238 = vld [vmem:[#allocation2 + $0x60] sm:$0xff]
        %v239 = vld [vmem:[#allocation2 + $0x68] sm:$0xff]
        %v240 = vld [vmem:[#allocation2 + $0x70] sm:$0xff]
        %v241 = vld [vmem:[#allocation2 + $0x78] sm:$0xff]
        %v242 = vld [vmem:[%s218] sm:$0xff]
        %v243 = vld [vmem:[%s224] sm:$0xff]
        %v244 = vld [vmem:[%s224 + $0x8] sm:$0xff]
        %vm245 = vcmask 130048
        %v247 = vsel %vm245, %v226, 0
        %v250 = vsel %vm245, %v227, 0
        %v253 = vsel %vm245, %v228, 0
        %v256 = vsel %vm245, %v229, 0
        %v259 = vsel %vm245, %v230, 0
        %v262 = vsel %vm245, %v231, 0
        %v265 = vsel %vm245, %v232, 0
        %v268 = vsel %vm245, %v233, 0
        %v271 = vsel %vm245, %v234, 0
        %v274 = vsel %vm245, %v235, 0
        %v277 = vsel %vm245, %v236, 0
        %v280 = vsel %vm245, %v237, 0
        %v283 = vsel %vm245, %v238, 0
        %v286 = vsel %vm245, %v239, 0
        %v289 = vsel %vm245, %v240, 0
        %v292 = vsel %vm245, %v241, 0
        %294 = vmatprep.subr.mxu0 0.0
        %295 = vmatpush1.msra.mxu0 %v243
        %296 = vmatprep.subr.mxu0 0.0
        %297 = vmatpush1.msra.mxu0 %v244
        %298 = vmatprep.subr.mxu0 0.0
        %299 = vmatpush1.msra.mxu0 0.0
        %300 = vmatprep.subr.mxu0 0.0
        %301 = vmatpush1.msra.mxu0 0.0
        %302 = vmatprep.subr.mxu0 0.0
        %303 = vmatpush1.msra.mxu0 0.0
        %304 = vmatprep.subr.mxu0 0.0
        %305 = vmatpush1.msra.mxu0 0.0
        %306 = vmatprep.subr.mxu0 0.0
        %307 = vmatpush1.msra.mxu0 0.0
        %308 = vmatprep.subr.mxu0 0.0
        %309 = vmatpush1.msra.mxu0 0.0
        %310 = vmatprep.subr.mxu0 0.0
        %311 = vmatpush1.msra.mxu0 0.0
        %312 = vmatprep.subr.mxu0 0.0
        %313 = vmatpush1.msra.mxu0 0.0
        %314 = vmatprep.subr.mxu0 0.0
        %315 = vmatpush1.msra.mxu0 0.0
        %316 = vmatprep.subr.mxu0 0.0
        %317 = vmatpush1.msra.mxu0 0.0
        %318 = vmatprep.subr.mxu0 0.0
        %319 = vmatpush1.msra.mxu0 0.0
        %320 = vmatprep.subr.mxu0 0.0
        %321 = vmatpush1.msra.mxu0 0.0
        %322 = vmatprep.subr.mxu0 0.0
        %323 = vmatpush1.msra.mxu0 0.0
        %324 = vmatprep.subr.mxu0 0.0
        %325 = vmatpush1.msra.mxu0 0.0
        %326 = vmatprep.subr.mxu0 0.0
        %327 = vmatpush1.msra.mxu0 0.0
        %328 = vmatprep.subr.mxu0 0.0
        %329 = vmatpush1.msra.mxu0 0.0
        %330 = vmatprep.subr.mxu0 0.0
        %331 = vmatpush1.msra.mxu0 0.0
        %332 = vmatprep.subr.mxu0 0.0
        %333 = vmatpush1.msra.mxu0 0.0
        %334 = vmatprep.subr.mxu0 0.0
        %335 = vmatpush1.msra.mxu0 0.0
        %336 = vmatprep.subr.mxu0 0.0
        %337 = vmatpush1.msra.mxu0 0.0
        %338 = vmatprep.subr.mxu0 0.0
        %339 = vmatpush1.msra.mxu0 0.0
        %340 = vmatprep.subr.mxu0 0.0
        %341 = vmatpush1.msra.mxu0 0.0
        %342 = vmatprep.subr.mxu0 0.0
        %343 = vmatpush1.msra.mxu0 0.0
        %344 = vmatprep.subr.mxu0 0.0
        %345 = vmatpush1.msra.mxu0 0.0
        %346 = vmatprep.subr.mxu0 0.0
        %347 = vmatpush1.msra.mxu0 0.0
        %348 = vmatprep.subr.mxu0 0.0
        %349 = vmatpush1.msra.mxu0 0.0
        %350 = vmatprep.subr.mxu0 0.0
        %351 = vmatpush1.msra.mxu0 0.0
        %352 = vmatprep.subr.mxu0 0.0
        %353 = vmatpush1.msra.mxu0 0.0
        %354 = vmatprep.subr.mxu0 0.0
        %355 = vmatpush1.msra.mxu0 0.0
        %356 = vmatprep.subr.mxu0 0.0
        %357 = vmatpush1.msra.mxu0 0.0
        %358 = vmatprep.mubr.f32.mxu0 0.0
        %359 = vmatmul.mubr.f32.gmra.mrb[0].mxu0 %v247
        %v360 = vpop.f32.mrb[0].mxu0
        %v361 = vadd.f32 0.0, %v360
        %v362 = vpop.f32.mrb[0].mxu0
        %363 = vmatprep.mubr.f32.mxu0 0.0
        %364 = vmatmul.mubr.f32.gmra.mrb[0].mxu0 %v250
        %v365 = vpop.f32.mrb[0].mxu0
        %v366 = vadd.f32 0.0, %v365
        %v367 = vpop.f32.mrb[0].mxu0
        %368 = vmatprep.mubr.f32.mxu0 0.0
        %369 = vmatmul.mubr.f32.gmra.mrb[0].mxu0 %v253
        %v370 = vpop.f32.mrb[0].mxu0
        %v371 = vadd.f32 0.0, %v370
        %v372 = vpop.f32.mrb[0].mxu0
        %373 = vmatprep.mubr.f32.mxu0 0.0
        %374 = vmatmul.mubr.f32.gmra.mrb[0].mxu0 %v256
        %v375 = vpop.f32.mrb[0].mxu0
        %v376 = vadd.f32 0.0, %v375
        %v377 = vpop.f32.mrb[0].mxu0
        %378 = vmatprep.mubr.f32.mxu0 0.0
        %379 = vmatmul.mubr.f32.gmra.mrb[0].mxu0 %v259
        %v380 = vpop.f32.mrb[0].mxu0
        %v381 = vadd.f32 0.0, %v380
        %v382 = vpop.f32.mrb[0].mxu0
        %383 = vmatprep.mubr.f32.mxu0 0.0
        %384 = vmatmul.mubr.f32.gmra.mrb[0].mxu0 %v262
        %v385 = vpop.f32.mrb[0].mxu0
        %v386 = vadd.f32 0.0, %v385
        %v387 = vpop.f32.mrb[0].mxu0
        %388 = vmatprep.mubr.f32.mxu0 0.0
        %389 = vmatmul.mubr.f32.gmra.mrb[0].mxu0 %v265
        %v390 = vpop.f32.mrb[0].mxu0
        %v391 = vadd.f32 0.0, %v390
        %v392 = vpop.f32.mrb[0].mxu0
        %393 = vmatprep.mubr.f32.mxu0 0.0
        %394 = vmatmul.mubr.f32.gmra.mrb[0].mxu0 %v268
        %v395 = vpop.f32.mrb[0].mxu0
        %v396 = vadd.f32 0.0, %v395
        %v397 = vpop.f32.mrb[0].mxu0
        %398 = vmatprep.mubr.f32.mxu0 0.0
        %399 = vmatmul.mubr.f32.gmra.mrb[0].mxu0 %v271
        %v400 = vpop.f32.mrb[0].mxu0
        %v401 = vadd.f32 0.0, %v400
        %v402 = vpop.f32.mrb[0].mxu0
        %403 = vmatprep.mubr.f32.mxu0 0.0
        %404 = vmatmul.mubr.f32.gmra.mrb[0].mxu0 %v274
        %v405 = vpop.f32.mrb[0].mxu0
        %v406 = vadd.f32 0.0, %v405
        %v407 = vpop.f32.mrb[0].mxu0
        %408 = vmatprep.mubr.f32.mxu0 0.0
        %409 = vmatmul.mubr.f32.gmra.mrb[0].mxu0 %v277
        %v410 = vpop.f32.mrb[0].mxu0
        %v411 = vadd.f32 0.0, %v410
        %v412 = vpop.f32.mrb[0].mxu0
        %413 = vmatprep.mubr.f32.mxu0 0.0
        %414 = vmatmul.mubr.f32.gmra.mrb[0].mxu0 %v280
        %v415 = vpop.f32.mrb[0].mxu0
        %v416 = vadd.f32 0.0, %v415
        %v417 = vpop.f32.mrb[0].mxu0
        %418 = vmatprep.mubr.f32.mxu0 0.0
        %419 = vmatmul.mubr.f32.gmra.mrb[0].mxu0 %v283
        %v420 = vpop.f32.mrb[0].mxu0
        %v421 = vadd.f32 0.0, %v420
        %v422 = vpop.f32.mrb[0].mxu0
        %423 = vmatprep.mubr.f32.mxu0 0.0
        %424 = vmatmul.mubr.f32.gmra.mrb[0].mxu0 %v286
        %v425 = vpop.f32.mrb[0].mxu0
        %v426 = vadd.f32 0.0, %v425
        %v427 = vpop.f32.mrb[0].mxu0
        %428 = vmatprep.mubr.f32.mxu0 0.0
        %429 = vmatmul.mubr.f32.gmra.mrb[0].mxu0 %v289
        %v430 = vpop.f32.mrb[0].mxu0
        %v431 = vadd.f32 0.0, %v430
        %v432 = vpop.f32.mrb[0].mxu0
        %433 = vmatprep.mubr.f32.mxu0 0.0
        %434 = vmatmul.mubr.f32.gmra.mrb[0].mxu0 %v292
        %v435 = vpop.f32.mrb[0].mxu0
        %v436 = vadd.f32 0.0, %v435
        %v437 = vpop.f32.mrb[0].mxu0
        %438 = vdwg.mxu0
        %v440 = vsel %vm245, %v242, 0
        %442 = vmatprep.subr.mxu0 0.0
        %443 = vmatpush1.msra.mxu0 %v361
        %444 = vmatprep.subr.mxu0 0.0
        %445 = vmatpush1.msra.mxu0 %v366
        %446 = vmatprep.subr.mxu0 0.0
        %447 = vmatpush1.msra.mxu0 0.0
        %448 = vmatprep.subr.mxu0 0.0
        %449 = vmatpush1.msra.mxu0 0.0
        %450 = vmatprep.subr.mxu0 0.0
        %451 = vmatpush1.msra.mxu0 0.0
        %452 = vmatprep.subr.mxu0 0.0
        %453 = vmatpush1.msra.mxu0 0.0
        %454 = vmatprep.subr.mxu0 0.0
        %455 = vmatpush1.msra.mxu0 0.0
        %456 = vmatprep.subr.mxu0 0.0
        %457 = vmatpush1.msra.mxu0 0.0
        %458 = vmatprep.subr.mxu0 0.0
        %459 = vmatpush1.msra.mxu0 0.0
        %460 = vmatprep.subr.mxu0 0.0
        %461 = vmatpush1.msra.mxu0 0.0
        %462 = vmatprep.subr.mxu0 0.0
        %463 = vmatpush1.msra.mxu0 0.0
        %464 = vmatprep.subr.mxu0 0.0
        %465 = vmatpush1.msra.mxu0 0.0
        %466 = vmatprep.subr.mxu0 0.0
        %467 = vmatpush1.msra.mxu0 0.0
        %468 = vmatprep.subr.mxu0 0.0
        %469 = vmatpush1.msra.mxu0 0.0
        %470 = vmatprep.subr.mxu0 0.0
        %471 = vmatpush1.msra.mxu0 0.0
        %472 = vmatprep.subr.mxu0 0.0
        %473 = vmatpush1.msra.mxu0 0.0
        %474 = vmatprep.subr.mxu0 0.0
        %475 = vmatpush1.msra.mxu0 0.0
        %476 = vmatprep.subr.mxu0 0.0
        %477 = vmatpush1.msra.mxu0 0.0
        %478 = vmatprep.subr.mxu0 0.0
        %479 = vmatpush1.msra.mxu0 0.0
        %480 = vmatprep.subr.mxu0 0.0
        %481 = vmatpush1.msra.mxu0 0.0
        %482 = vmatprep.subr.mxu0 0.0
        %483 = vmatpush1.msra.mxu0 0.0
        %484 = vmatprep.subr.mxu0 0.0
        %485 = vmatpush1.msra.mxu0 0.0
        %486 = vmatprep.subr.mxu0 0.0
        %487 = vmatpush1.msra.mxu0 0.0
        %488 = vmatprep.subr.mxu0 0.0
        %489 = vmatpush1.msra.mxu0 0.0
        %490 = vmatprep.subr.mxu0 0.0
        %491 = vmatpush1.msra.mxu0 0.0
        %492 = vmatprep.subr.mxu0 0.0
        %493 = vmatpush1.msra.mxu0 0.0
        %494 = vmatprep.subr.mxu0 0.0
        %495 = vmatpush1.msra.mxu0 0.0
        %496 = vmatprep.subr.mxu0 0.0
        %497 = vmatpush1.msra.mxu0 0.0
        %498 = vmatprep.subr.mxu0 0.0
        %499 = vmatpush1.msra.mxu0 0.0
        %500 = vmatprep.subr.mxu0 0.0
        %501 = vmatpush1.msra.mxu0 0.0
        %502 = vmatprep.subr.mxu0 0.0
        %503 = vmatpush1.msra.mxu0 0.0
        %504 = vmatprep.subr.mxu0 0.0
        %505 = vmatpush1.msra.mxu0 0.0
        %506 = vmatprep.mubr.f32.mxu0 0.0
        %507 = vmatmul.mubr.f32.gmra.mrb[0].mxu0 %v440
        %v508 = vpop.f32.mrb[0].mxu0
        %v509 = vadd.f32 0.0, %v508
        %v510 = vpop.f32.mrb[0].mxu0
        %511 = vdwg.mxu0
        %512 = vmatprep.subr.mxu0 0.0
        %513 = vmatpush1.msra.mxu0 %v371
        %514 = vmatprep.subr.mxu0 0.0
        %515 = vmatpush1.msra.mxu0 %v376
        %516 = vmatprep.subr.mxu0 0.0
        %517 = vmatpush1.msra.mxu0 0.0
        %518 = vmatprep.subr.mxu0 0.0
        %519 = vmatpush1.msra.mxu0 0.0
        %520 = vmatprep.subr.mxu0 0.0
        %521 = vmatpush1.msra.mxu0 0.0
        %522 = vmatprep.subr.mxu0 0.0
        %523 = vmatpush1.msra.mxu0 0.0
        %524 = vmatprep.subr.mxu0 0.0
        %525 = vmatpush1.msra.mxu0 0.0
        %526 = vmatprep.subr.mxu0 0.0
        %527 = vmatpush1.msra.mxu0 0.0
        %528 = vmatprep.subr.mxu0 0.0
        %529 = vmatpush1.msra.mxu0 0.0
        %530 = vmatprep.subr.mxu0 0.0
        %531 = vmatpush1.msra.mxu0 0.0
        %532 = vmatprep.subr.mxu0 0.0
        %533 = vmatpush1.msra.mxu0 0.0
        %534 = vmatprep.subr.mxu0 0.0
        %535 = vmatpush1.msra.mxu0 0.0
        %536 = vmatprep.subr.mxu0 0.0
        %537 = vmatpush1.msra.mxu0 0.0
        %538 = vmatprep.subr.mxu0 0.0
        %539 = vmatpush1.msra.mxu0 0.0
        %540 = vmatprep.subr.mxu0 0.0
        %541 = vmatpush1.msra.mxu0 0.0
        %542 = vmatprep.subr.mxu0 0.0
        %543 = vmatpush1.msra.mxu0 0.0
        %544 = vmatprep.subr.mxu0 0.0
        %545 = vmatpush1.msra.mxu0 0.0
        %546 = vmatprep.subr.mxu0 0.0
        %547 = vmatpush1.msra.mxu0 0.0
        %548 = vmatprep.subr.mxu0 0.0
        %549 = vmatpush1.msra.mxu0 0.0
        %550 = vmatprep.subr.mxu0 0.0
        %551 = vmatpush1.msra.mxu0 0.0
        %552 = vmatprep.subr.mxu0 0.0
        %553 = vmatpush1.msra.mxu0 0.0
        %554 = vmatprep.subr.mxu0 0.0
        %555 = vmatpush1.msra.mxu0 0.0
        %556 = vmatprep.subr.mxu0 0.0
        %557 = vmatpush1.msra.mxu0 0.0
        %558 = vmatprep.subr.mxu0 0.0
        %559 = vmatpush1.msra.mxu0 0.0
        %560 = vmatprep.subr.mxu0 0.0
        %561 = vmatpush1.msra.mxu0 0.0
        %562 = vmatprep.subr.mxu0 0.0
        %563 = vmatpush1.msra.mxu0 0.0
        %564 = vmatprep.subr.mxu0 0.0
        %565 = vmatpush1.msra.mxu0 0.0
        %566 = vmatprep.subr.mxu0 0.0
        %567 = vmatpush1.msra.mxu0 0.0
        %568 = vmatprep.subr.mxu0 0.0
        %569 = vmatpush1.msra.mxu0 0.0
        %570 = vmatprep.subr.mxu0 0.0
        %571 = vmatpush1.msra.mxu0 0.0
        %572 = vmatprep.subr.mxu0 0.0
        %573 = vmatpush1.msra.mxu0 0.0
        %574 = vmatprep.subr.mxu0 0.0
        %575 = vmatpush1.msra.mxu0 0.0
        %576 = vmatprep.mubr.f32.mxu0 0.0
        %577 = vmatmul.mubr.f32.gmra.mrb[0].mxu0 %v440
        %v578 = vpop.f32.mrb[0].mxu0
        %v579 = vadd.f32 0.0, %v578
        %v580 = vpop.f32.mrb[0].mxu0
        %581 = vdwg.mxu0
        %582 = vmatprep.subr.mxu0 0.0
        %583 = vmatpush1.msra.mxu0 %v381
        %584 = vmatprep.subr.mxu0 0.0
        %585 = vmatpush1.msra.mxu0 %v386
        %586 = vmatprep.subr.mxu0 0.0
        %587 = vmatpush1.msra.mxu0 0.0
        %588 = vmatprep.subr.mxu0 0.0
        %589 = vmatpush1.msra.mxu0 0.0
        %590 = vmatprep.subr.mxu0 0.0
        %591 = vmatpush1.msra.mxu0 0.0
        %592 = vmatprep.subr.mxu0 0.0
        %593 = vmatpush1.msra.mxu0 0.0
        %594 = vmatprep.subr.mxu0 0.0
        %595 = vmatpush1.msra.mxu0 0.0
        %596 = vmatprep.subr.mxu0 0.0
        %597 = vmatpush1.msra.mxu0 0.0
        %598 = vmatprep.subr.mxu0 0.0
        %599 = vmatpush1.msra.mxu0 0.0
        %600 = vmatprep.subr.mxu0 0.0
        %601 = vmatpush1.msra.mxu0 0.0
        %602 = vmatprep.subr.mxu0 0.0
        %603 = vmatpush1.msra.mxu0 0.0
        %604 = vmatprep.subr.mxu0 0.0
        %605 = vmatpush1.msra.mxu0 0.0
        %606 = vmatprep.subr.mxu0 0.0
        %607 = vmatpush1.msra.mxu0 0.0
        %608 = vmatprep.subr.mxu0 0.0
        %609 = vmatpush1.msra.mxu0 0.0
        %610 = vmatprep.subr.mxu0 0.0
        %611 = vmatpush1.msra.mxu0 0.0
        %612 = vmatprep.subr.mxu0 0.0
        %613 = vmatpush1.msra.mxu0 0.0
        %614 = vmatprep.subr.mxu0 0.0
        %615 = vmatpush1.msra.mxu0 0.0
        %616 = vmatprep.subr.mxu0 0.0
        %617 = vmatpush1.msra.mxu0 0.0
        %618 = vmatprep.subr.mxu0 0.0
        %619 = vmatpush1.msra.mxu0 0.0
        %620 = vmatprep.subr.mxu0 0.0
        %621 = vmatpush1.msra.mxu0 0.0
        %622 = vmatprep.subr.mxu0 0.0
        %623 = vmatpush1.msra.mxu0 0.0
        %624 = vmatprep.subr.mxu0 0.0
        %625 = vmatpush1.msra.mxu0 0.0
        %626 = vmatprep.subr.mxu0 0.0
        %627 = vmatpush1.msra.mxu0 0.0
        %628 = vmatprep.subr.mxu0 0.0
        %629 = vmatpush1.msra.mxu0 0.0
        %630 = vmatprep.subr.mxu0 0.0
        %631 = vmatpush1.msra.mxu0 0.0
        %632 = vmatprep.subr.mxu0 0.0
        %633 = vmatpush1.msra.mxu0 0.0
        %634 = vmatprep.subr.mxu0 0.0
        %635 = vmatpush1.msra.mxu0 0.0
        %636 = vmatprep.subr.mxu0 0.0
        %637 = vmatpush1.msra.mxu0 0.0
        %638 = vmatprep.subr.mxu0 0.0
        %639 = vmatpush1.msra.mxu0 0.0
        %640 = vmatprep.subr.mxu0 0.0
        %641 = vmatpush1.msra.mxu0 0.0
        %642 = vmatprep.subr.mxu0 0.0
        %643 = vmatpush1.msra.mxu0 0.0
        %644 = vmatprep.subr.mxu0 0.0
        %645 = vmatpush1.msra.mxu0 0.0
        %646 = vmatprep.mubr.f32.mxu0 0.0
        %647 = vmatmul.mubr.f32.gmra.mrb[0].mxu0 %v440
        %v648 = vpop.f32.mrb[0].mxu0
        %v649 = vadd.f32 0.0, %v648
        %v650 = vpop.f32.mrb[0].mxu0
        %651 = vdwg.mxu0
        %652 = vmatprep.subr.mxu0 0.0
        %653 = vmatpush1.msra.mxu0 %v391
        %654 = vmatprep.subr.mxu0 0.0
        %655 = vmatpush1.msra.mxu0 %v396
        %656 = vmatprep.subr.mxu0 0.0
        %657 = vmatpush1.msra.mxu0 0.0
        %658 = vmatprep.subr.mxu0 0.0
        %659 = vmatpush1.msra.mxu0 0.0
        %660 = vmatprep.subr.mxu0 0.0
        %661 = vmatpush1.msra.mxu0 0.0
        %662 = vmatprep.subr.mxu0 0.0
        %663 = vmatpush1.msra.mxu0 0.0
        %664 = vmatprep.subr.mxu0 0.0
        %665 = vmatpush1.msra.mxu0 0.0
        %666 = vmatprep.subr.mxu0 0.0
        %667 = vmatpush1.msra.mxu0 0.0
        %668 = vmatprep.subr.mxu0 0.0
        %669 = vmatpush1.msra.mxu0 0.0
        %670 = vmatprep.subr.mxu0 0.0
        %671 = vmatpush1.msra.mxu0 0.0
        %672 = vmatprep.subr.mxu0 0.0
        %673 = vmatpush1.msra.mxu0 0.0
        %674 = vmatprep.subr.mxu0 0.0
        %675 = vmatpush1.msra.mxu0 0.0
        %676 = vmatprep.subr.mxu0 0.0
        %677 = vmatpush1.msra.mxu0 0.0
        %678 = vmatprep.subr.mxu0 0.0
        %679 = vmatpush1.msra.mxu0 0.0
        %680 = vmatprep.subr.mxu0 0.0
        %681 = vmatpush1.msra.mxu0 0.0
        %682 = vmatprep.subr.mxu0 0.0
        %683 = vmatpush1.msra.mxu0 0.0
        %684 = vmatprep.subr.mxu0 0.0
        %685 = vmatpush1.msra.mxu0 0.0
        %686 = vmatprep.subr.mxu0 0.0
        %687 = vmatpush1.msra.mxu0 0.0
        %688 = vmatprep.subr.mxu0 0.0
        %689 = vmatpush1.msra.mxu0 0.0
        %690 = vmatprep.subr.mxu0 0.0
        %691 = vmatpush1.msra.mxu0 0.0
        %692 = vmatprep.subr.mxu0 0.0
        %693 = vmatpush1.msra.mxu0 0.0
        %694 = vmatprep.subr.mxu0 0.0
        %695 = vmatpush1.msra.mxu0 0.0
        %696 = vmatprep.subr.mxu0 0.0
        %697 = vmatpush1.msra.mxu0 0.0
        %698 = vmatprep.subr.mxu0 0.0
        %699 = vmatpush1.msra.mxu0 0.0
        %700 = vmatprep.subr.mxu0 0.0
        %701 = vmatpush1.msra.mxu0 0.0
        %702 = vmatprep.subr.mxu0 0.0
        %703 = vmatpush1.msra.mxu0 0.0
        %704 = vmatprep.subr.mxu0 0.0
        %705 = vmatpush1.msra.mxu0 0.0
        %706 = vmatprep.subr.mxu0 0.0
        %707 = vmatpush1.msra.mxu0 0.0
        %708 = vmatprep.subr.mxu0 0.0
        %709 = vmatpush1.msra.mxu0 0.0
        %710 = vmatprep.subr.mxu0 0.0
        %711 = vmatpush1.msra.mxu0 0.0
        %712 = vmatprep.subr.mxu0 0.0
        %713 = vmatpush1.msra.mxu0 0.0
        %714 = vmatprep.subr.mxu0 0.0
        %715 = vmatpush1.msra.mxu0 0.0
        %716 = vmatprep.mubr.f32.mxu0 0.0
        %717 = vmatmul.mubr.f32.gmra.mrb[0].mxu0 %v440
        %v718 = vpop.f32.mrb[0].mxu0
        %v719 = vadd.f32 0.0, %v718
        %v720 = vpop.f32.mrb[0].mxu0
        %721 = vdwg.mxu0
        %722 = vmatprep.subr.mxu0 0.0
        %723 = vmatpush1.msra.mxu0 %v401
        %724 = vmatprep.subr.mxu0 0.0
        %725 = vmatpush1.msra.mxu0 %v406
        %726 = vmatprep.subr.mxu0 0.0
        %727 = vmatpush1.msra.mxu0 0.0
        %728 = vmatprep.subr.mxu0 0.0
        %729 = vmatpush1.msra.mxu0 0.0
        %730 = vmatprep.subr.mxu0 0.0
        %731 = vmatpush1.msra.mxu0 0.0
        %732 = vmatprep.subr.mxu0 0.0
        %733 = vmatpush1.msra.mxu0 0.0
        %734 = vmatprep.subr.mxu0 0.0
        %735 = vmatpush1.msra.mxu0 0.0
        %736 = vmatprep.subr.mxu0 0.0
        %737 = vmatpush1.msra.mxu0 0.0
        %738 = vmatprep.subr.mxu0 0.0
        %739 = vmatpush1.msra.mxu0 0.0
        %740 = vmatprep.subr.mxu0 0.0
        %741 = vmatpush1.msra.mxu0 0.0
        %742 = vmatprep.subr.mxu0 0.0
        %743 = vmatpush1.msra.mxu0 0.0
        %744 = vmatprep.subr.mxu0 0.0
        %745 = vmatpush1.msra.mxu0 0.0
        %746 = vmatprep.subr.mxu0 0.0
        %747 = vmatpush1.msra.mxu0 0.0
        %748 = vmatprep.subr.mxu0 0.0
        %749 = vmatpush1.msra.mxu0 0.0
        %750 = vmatprep.subr.mxu0 0.0
        %751 = vmatpush1.msra.mxu0 0.0
        %752 = vmatprep.subr.mxu0 0.0
        %753 = vmatpush1.msra.mxu0 0.0
        %754 = vmatprep.subr.mxu0 0.0
        %755 = vmatpush1.msra.mxu0 0.0
        %756 = vmatprep.subr.mxu0 0.0
        %757 = vmatpush1.msra.mxu0 0.0
        %758 = vmatprep.subr.mxu0 0.0
        %759 = vmatpush1.msra.mxu0 0.0
        %760 = vmatprep.subr.mxu0 0.0
        %761 = vmatpush1.msra.mxu0 0.0
        %762 = vmatprep.subr.mxu0 0.0
        %763 = vmatpush1.msra.mxu0 0.0
        %764 = vmatprep.subr.mxu0 0.0
        %765 = vmatpush1.msra.mxu0 0.0
        %766 = vmatprep.subr.mxu0 0.0
        %767 = vmatpush1.msra.mxu0 0.0
        %768 = vmatprep.subr.mxu0 0.0
        %769 = vmatpush1.msra.mxu0 0.0
        %770 = vmatprep.subr.mxu0 0.0
        %771 = vmatpush1.msra.mxu0 0.0
        %772 = vmatprep.subr.mxu0 0.0
        %773 = vmatpush1.msra.mxu0 0.0
        %774 = vmatprep.subr.mxu0 0.0
        %775 = vmatpush1.msra.mxu0 0.0
        %776 = vmatprep.subr.mxu0 0.0
        %777 = vmatpush1.msra.mxu0 0.0
        %778 = vmatprep.subr.mxu0 0.0
        %779 = vmatpush1.msra.mxu0 0.0
        %780 = vmatprep.subr.mxu0 0.0
        %781 = vmatpush1.msra.mxu0 0.0
        %782 = vmatprep.subr.mxu0 0.0
        %783 = vmatpush1.msra.mxu0 0.0
        %784 = vmatprep.subr.mxu0 0.0
        %785 = vmatpush1.msra.mxu0 0.0
        %786 = vmatprep.mubr.f32.mxu0 0.0
        %787 = vmatmul.mubr.f32.gmra.mrb[0].mxu0 %v440
        %v788 = vpop.f32.mrb[0].mxu0
        %v789 = vadd.f32 0.0, %v788
        %v790 = vpop.f32.mrb[0].mxu0
        %791 = vdwg.mxu0
        %792 = vmatprep.subr.mxu0 0.0
        %793 = vmatpush1.msra.mxu0 %v411
        %794 = vmatprep.subr.mxu0 0.0
        %795 = vmatpush1.msra.mxu0 %v416
        %796 = vmatprep.subr.mxu0 0.0
        %797 = vmatpush1.msra.mxu0 0.0
        %798 = vmatprep.subr.mxu0 0.0
        %799 = vmatpush1.msra.mxu0 0.0
        %800 = vmatprep.subr.mxu0 0.0
        %801 = vmatpush1.msra.mxu0 0.0
        %802 = vmatprep.subr.mxu0 0.0
        %803 = vmatpush1.msra.mxu0 0.0
        %804 = vmatprep.subr.mxu0 0.0
        %805 = vmatpush1.msra.mxu0 0.0
        %806 = vmatprep.subr.mxu0 0.0
        %807 = vmatpush1.msra.mxu0 0.0
        %808 = vmatprep.subr.mxu0 0.0
        %809 = vmatpush1.msra.mxu0 0.0
        %810 = vmatprep.subr.mxu0 0.0
        %811 = vmatpush1.msra.mxu0 0.0
        %812 = vmatprep.subr.mxu0 0.0
        %813 = vmatpush1.msra.mxu0 0.0
        %814 = vmatprep.subr.mxu0 0.0
        %815 = vmatpush1.msra.mxu0 0.0
        %816 = vmatprep.subr.mxu0 0.0
        %817 = vmatpush1.msra.mxu0 0.0
        %818 = vmatprep.subr.mxu0 0.0
        %819 = vmatpush1.msra.mxu0 0.0
        %820 = vmatprep.subr.mxu0 0.0
        %821 = vmatpush1.msra.mxu0 0.0
        %822 = vmatprep.subr.mxu0 0.0
        %823 = vmatpush1.msra.mxu0 0.0
        %824 = vmatprep.subr.mxu0 0.0
        %825 = vmatpush1.msra.mxu0 0.0
        %826 = vmatprep.subr.mxu0 0.0
        %827 = vmatpush1.msra.mxu0 0.0
        %828 = vmatprep.subr.mxu0 0.0
        %829 = vmatpush1.msra.mxu0 0.0
        %830 = vmatprep.subr.mxu0 0.0
        %831 = vmatpush1.msra.mxu0 0.0
        %832 = vmatprep.subr.mxu0 0.0
        %833 = vmatpush1.msra.mxu0 0.0
        %834 = vmatprep.subr.mxu0 0.0
        %835 = vmatpush1.msra.mxu0 0.0
        %836 = vmatprep.subr.mxu0 0.0
        %837 = vmatpush1.msra.mxu0 0.0
        %838 = vmatprep.subr.mxu0 0.0
        %839 = vmatpush1.msra.mxu0 0.0
        %840 = vmatprep.subr.mxu0 0.0
        %841 = vmatpush1.msra.mxu0 0.0
        %842 = vmatprep.subr.mxu0 0.0
        %843 = vmatpush1.msra.mxu0 0.0
        %844 = vmatprep.subr.mxu0 0.0
        %845 = vmatpush1.msra.mxu0 0.0
        %846 = vmatprep.subr.mxu0 0.0
        %847 = vmatpush1.msra.mxu0 0.0
        %848 = vmatprep.subr.mxu0 0.0
        %849 = vmatpush1.msra.mxu0 0.0
        %850 = vmatprep.subr.mxu0 0.0
        %851 = vmatpush1.msra.mxu0 0.0
        %852 = vmatprep.subr.mxu0 0.0
        %853 = vmatpush1.msra.mxu0 0.0
        %854 = vmatprep.subr.mxu0 0.0
        %855 = vmatpush1.msra.mxu0 0.0
        %856 = vmatprep.mubr.f32.mxu0 0.0
        %857 = vmatmul.mubr.f32.gmra.mrb[0].mxu0 %v440
        %v858 = vpop.f32.mrb[0].mxu0
        %v859 = vadd.f32 0.0, %v858
        %v860 = vpop.f32.mrb[0].mxu0
        %861 = vdwg.mxu0
        %862 = vmatprep.subr.mxu0 0.0
        %863 = vmatpush1.msra.mxu0 %v421
        %864 = vmatprep.subr.mxu0 0.0
        %865 = vmatpush1.msra.mxu0 %v426
        %866 = vmatprep.subr.mxu0 0.0
        %867 = vmatpush1.msra.mxu0 0.0
        %868 = vmatprep.subr.mxu0 0.0
        %869 = vmatpush1.msra.mxu0 0.0
        %870 = vmatprep.subr.mxu0 0.0
        %871 = vmatpush1.msra.mxu0 0.0
        %872 = vmatprep.subr.mxu0 0.0
        %873 = vmatpush1.msra.mxu0 0.0
        %874 = vmatprep.subr.mxu0 0.0
        %875 = vmatpush1.msra.mxu0 0.0
        %876 = vmatprep.subr.mxu0 0.0
        %877 = vmatpush1.msra.mxu0 0.0
        %878 = vmatprep.subr.mxu0 0.0
        %879 = vmatpush1.msra.mxu0 0.0
        %880 = vmatprep.subr.mxu0 0.0
        %881 = vmatpush1.msra.mxu0 0.0
        %882 = vmatprep.subr.mxu0 0.0
        %883 = vmatpush1.msra.mxu0 0.0
        %884 = vmatprep.subr.mxu0 0.0
        %885 = vmatpush1.msra.mxu0 0.0
        %886 = vmatprep.subr.mxu0 0.0
        %887 = vmatpush1.msra.mxu0 0.0
        %888 = vmatprep.subr.mxu0 0.0
        %889 = vmatpush1.msra.mxu0 0.0
        %890 = vmatprep.subr.mxu0 0.0
        %891 = vmatpush1.msra.mxu0 0.0
        %892 = vmatprep.subr.mxu0 0.0
        %893 = vmatpush1.msra.mxu0 0.0
        %894 = vmatprep.subr.mxu0 0.0
        %895 = vmatpush1.msra.mxu0 0.0
        %896 = vmatprep.subr.mxu0 0.0
        %897 = vmatpush1.msra.mxu0 0.0
        %898 = vmatprep.subr.mxu0 0.0
        %899 = vmatpush1.msra.mxu0 0.0
        %900 = vmatprep.subr.mxu0 0.0
        %901 = vmatpush1.msra.mxu0 0.0
        %902 = vmatprep.subr.mxu0 0.0
        %903 = vmatpush1.msra.mxu0 0.0
        %904 = vmatprep.subr.mxu0 0.0
        %905 = vmatpush1.msra.mxu0 0.0
        %906 = vmatprep.subr.mxu0 0.0
        %907 = vmatpush1.msra.mxu0 0.0
        %908 = vmatprep.subr.mxu0 0.0
        %909 = vmatpush1.msra.mxu0 0.0
        %910 = vmatprep.subr.mxu0 0.0
        %911 = vmatpush1.msra.mxu0 0.0
        %912 = vmatprep.subr.mxu0 0.0
        %913 = vmatpush1.msra.mxu0 0.0
        %914 = vmatprep.subr.mxu0 0.0
        %915 = vmatpush1.msra.mxu0 0.0
        %916 = vmatprep.subr.mxu0 0.0
        %917 = vmatpush1.msra.mxu0 0.0
        %918 = vmatprep.subr.mxu0 0.0
        %919 = vmatpush1.msra.mxu0 0.0
        %920 = vmatprep.subr.mxu0 0.0
        %921 = vmatpush1.msra.mxu0 0.0
        %922 = vmatprep.subr.mxu0 0.0
        %923 = vmatpush1.msra.mxu0 0.0
        %924 = vmatprep.subr.mxu0 0.0
        %925 = vmatpush1.msra.mxu0 0.0
        %926 = vmatprep.mubr.f32.mxu0 0.0
        %927 = vmatmul.mubr.f32.gmra.mrb[0].mxu0 %v440
        %v928 = vpop.f32.mrb[0].mxu0
        %v929 = vadd.f32 0.0, %v928
        %v930 = vpop.f32.mrb[0].mxu0
        %931 = vdwg.mxu0
        %932 = vmatprep.subr.mxu0 0.0
        %933 = vmatpush1.msra.mxu0 %v431
        %934 = vmatprep.subr.mxu0 0.0
        %935 = vmatpush1.msra.mxu0 %v436
        %936 = vmatprep.subr.mxu0 0.0
        %937 = vmatpush1.msra.mxu0 0.0
        %938 = vmatprep.subr.mxu0 0.0
        %939 = vmatpush1.msra.mxu0 0.0
        %940 = vmatprep.subr.mxu0 0.0
        %941 = vmatpush1.msra.mxu0 0.0
        %942 = vmatprep.subr.mxu0 0.0
        %943 = vmatpush1.msra.mxu0 0.0
        %944 = vmatprep.subr.mxu0 0.0
        %945 = vmatpush1.msra.mxu0 0.0
        %946 = vmatprep.subr.mxu0 0.0
        %947 = vmatpush1.msra.mxu0 0.0
        %948 = vmatprep.subr.mxu0 0.0
        %949 = vmatpush1.msra.mxu0 0.0
        %950 = vmatprep.subr.mxu0 0.0
        %951 = vmatpush1.msra.mxu0 0.0
        %952 = vmatprep.subr.mxu0 0.0
        %953 = vmatpush1.msra.mxu0 0.0
        %954 = vmatprep.subr.mxu0 0.0
        %955 = vmatpush1.msra.mxu0 0.0
        %956 = vmatprep.subr.mxu0 0.0
        %957 = vmatpush1.msra.mxu0 0.0
        %958 = vmatprep.subr.mxu0 0.0
        %959 = vmatpush1.msra.mxu0 0.0
        %960 = vmatprep.subr.mxu0 0.0
        %961 = vmatpush1.msra.mxu0 0.0
        %962 = vmatprep.subr.mxu0 0.0
        %963 = vmatpush1.msra.mxu0 0.0
        %964 = vmatprep.subr.mxu0 0.0
        %965 = vmatpush1.msra.mxu0 0.0
        %966 = vmatprep.subr.mxu0 0.0
        %967 = vmatpush1.msra.mxu0 0.0
        %968 = vmatprep.subr.mxu0 0.0
        %969 = vmatpush1.msra.mxu0 0.0
        %970 = vmatprep.subr.mxu0 0.0
        %971 = vmatpush1.msra.mxu0 0.0
        %972 = vmatprep.subr.mxu0 0.0
        %973 = vmatpush1.msra.mxu0 0.0
        %974 = vmatprep.subr.mxu0 0.0
        %975 = vmatpush1.msra.mxu0 0.0
        %976 = vmatprep.subr.mxu0 0.0
        %977 = vmatpush1.msra.mxu0 0.0
        %978 = vmatprep.subr.mxu0 0.0
        %979 = vmatpush1.msra.mxu0 0.0
        %980 = vmatprep.subr.mxu0 0.0
        %981 = vmatpush1.msra.mxu0 0.0
        %982 = vmatprep.subr.mxu0 0.0
        %983 = vmatpush1.msra.mxu0 0.0
        %984 = vmatprep.subr.mxu0 0.0
        %985 = vmatpush1.msra.mxu0 0.0
        %986 = vmatprep.subr.mxu0 0.0
        %987 = vmatpush1.msra.mxu0 0.0
        %988 = vmatprep.subr.mxu0 0.0
        %989 = vmatpush1.msra.mxu0 0.0
        %990 = vmatprep.subr.mxu0 0.0
        %991 = vmatpush1.msra.mxu0 0.0
        %992 = vmatprep.subr.mxu0 0.0
        %993 = vmatpush1.msra.mxu0 0.0
        %994 = vmatprep.subr.mxu0 0.0
        %995 = vmatpush1.msra.mxu0 0.0
        %996 = vmatprep.mubr.f32.mxu0 0.0
        %997 = vmatmul.mubr.f32.gmra.mrb[0].mxu0 %v440
        %v998 = vpop.f32.mrb[0].mxu0
        %v999 = vadd.f32 0.0, %v998
        %v1000 = vpop.f32.mrb[0].mxu0
        %1001 = vdwg.mxu0
        %v1002 = vmax.f32 %v509, 0.0
        %v1003 = vmax.f32 %v579, 0.0
        %v1004 = vmax.f32 %v649, 0.0
        %v1005 = vmax.f32 %v719, 0.0
        %v1006 = vmax.f32 %v789, 0.0
        %v1007 = vmax.f32 %v859, 0.0
        %v1008 = vmax.f32 %v929, 0.0
        %v1009 = vmax.f32 %v999, 0.0
        %v1010 = vmin.f32 %v1002, 1.0
        %v1011 = vmin.f32 %v1003, 1.0
        %v1012 = vmin.f32 %v1004, 1.0
        %v1013 = vmin.f32 %v1005, 1.0
        %v1014 = vmin.f32 %v1006, 1.0
        %v1015 = vmin.f32 %v1007, 1.0
        %v1016 = vmin.f32 %v1008, 1.0
        %v1017 = vmin.f32 %v1009, 1.0
        %vm1018 = vcmask 64512
        %1019 = vst.msk [vmem:[%s214] sm:$0xff] %vm1018, %v1010
        %1020 = vst.msk [vmem:[%s214 + $0x8] sm:$0xff] %vm1018, %v1011
        %1021 = vst.msk [vmem:[%s214 + $0x10] sm:$0xff] %vm1018, %v1012
        %1022 = vst.msk [vmem:[%s214 + $0x18] sm:$0xff] %vm1018, %v1013
        %1023 = vst.msk [vmem:[%s214 + $0x20] sm:$0xff] %vm1018, %v1014
        %1024 = vst.msk [vmem:[%s214 + $0x28] sm:$0xff] %vm1018, %v1015
        %1025 = vst.msk [vmem:[%s214 + $0x30] sm:$0xff] %vm1018, %v1016
        %1026 = vst.msk [vmem:[%s214 + $0x38] sm:$0xff] %vm1018, %v1017
        %s1027 = sand.u32 %s118, 1
        %s1028 = scalar_lea.sflag [#allocation4], %s1027
        %s1029 = sand.u32 %s118, 1
        %s1030 = smul.addr %s1029, 64
        %s1031 = scalar_lea.vmem [#allocation5], %s1030
        // Predicated region
        $region37: #{tpu_custom_call.1} parent=31 // pred_check
          %p1032 = pneg %p128
        $region38: #{tpu_custom_call.1} parent=31 // pred_check_branch
          %1034 = sbr.rel (%p1032) target = $region40
        $region39: #{tpu_custom_call.1} parent=31 // pred_region
          %s1035 = smul.u32 8, %s22
          %s1037 = ssub.s32 1024, 1024
          %1038 = vsyncadd %s1028, %s1037
          %s1039 = smul.addr %s23, 8
          %s1040 = sadd.s32 %s1035, %s1039
          %s1041 = smul.addr %s1040, 128
          %s1042 = scalar_lea.hbm %s3, %s1041
          %s1043 = sshll.u32 %s1031, 4
          %s1044 = int_to_ptr.vmem [resolvable:$true] %s1043
          %1049 = dma.vmem_to_hbm [thread:$0]  %s1044, 1024, %s1042, %s1028, 128, 128, 8
        $region40: #{tpu_custom_call.1} parent=31 // pred_fallthru
          _
      $region32: #{tpu_custom_call.1} parent=5 // pred_fallthru
        _
      %p1050 = scmp.le.s32.totalorder 2, %s13
      // Predicated region
      $region41: #{tpu_custom_call.1} parent=5 // pred_check
        %p1051 = pneg %p1050
      $region42: #{tpu_custom_call.1} parent=5 // pred_check_branch
        %1053 = sbr.rel (%p1051) target = $region44
      $region43: #{tpu_custom_call.1} parent=5 // pred_region
        %s1054 = ssub.s32 %s13, 2
        // Predicated region
        $region45: #{tpu_custom_call.1} parent=43 // pred_check
          %p1055 = pneg %p134
        $region46: #{tpu_custom_call.1} parent=43 // pred_check_branch
          %1057 = sbr.rel (%p1055) target = $region48
        $region47: #{tpu_custom_call.1} parent=43 // pred_region
          %s1058 = sand.u32 %s119, 1
          %s1059 = scalar_lea.sflag [#allocation4], %s1058
          %s1060 = sand.u32 %s119, 1
          %s1061 = smul.addr %s1060, 64
          %s1062 = scalar_lea.vmem [#allocation5], %s1061
          %1063 = dma.done %s1059, 1024
        $region48: #{tpu_custom_call.1} parent=43 // pred_fallthru
          _
      $region44: #{tpu_custom_call.1} parent=5 // pred_fallthru
        _
    $region6: #{tpu_custom_call.1} parent=1 // loop_footer
      %s17 = sadd.s32 1, %s13
    $region7: #{tpu_custom_call.1} parent=1 // loop_footer_branch
      %12 = sbr.rel target = $region3
    $region8: #{tpu_custom_call.1} parent=1 // loop_exit
      _
    %1064 = vsyncpa [#allocation3], 1
    %s1065 = scalar_lea.sflag [#allocation3], 1
    %1066 = vsyncpa %s1065, 1
    %1067 = vsyncpa [#allocation4], 1
    %s1068 = scalar_lea.sflag [#allocation4], 1
    %1069 = vsyncpa %s1068, 1

</llo_original>
